<compile_context>
chip_gen: v5e
topology: v5e:2x2
jax: 0.10.0
libtpu: 0.0.40
codegen_flags: <defaults>
</compile_context>

<pallas_src>
import math

import jax
import jax.numpy as jnp
from jax.experimental import pallas as pl
from jax.experimental.pallas import tpu as pltpu  # noqa: F401  (TPU backend / tuning hooks)

BN_EPS = 1e-5


def attention_resnet_kernel(x_ref, wproj_ref, wattn_ref, wblk_ref, bvec_ref, out_ref):
    f32 = jnp.float32
    B = x_ref.shape[0]
    H = wproj_ref.shape[1] // 3
    C = wattn_ref.shape[1] - 4 * H
    n_blocks = wblk_ref.shape[0]

    x = x_ref[...]              # (B, Dtot) = [x0 | tf | mir]
    w_proj = wproj_ref[...]     # (Dtot, 3H) block-diagonal
    w_attn = wattn_ref[...]     # (H, 4H + C) = [wq*scale | wk | wv | wo | wc]
    b_vec = bvec_ref[...]       # (3 + 2*n_blocks, 3H) packed bias / BN rows

    # --- fused modality projections (single MXU pass) + ReLU ---
    e_all = jnp.maximum(
        jnp.dot(x, w_proj, preferred_element_type=f32) + b_vec[0:1, :], 0.0)   # (B, 3H)
    e0 = e_all[:, 0:H]                                                          # query source
    ekv = jnp.concatenate([e_all[:, H:2 * H], e_all[:, 2 * H:3 * H]], axis=0)   # (2B, H)

    # --- CrossAttentionFusion: MultiheadAttention(H, 1 head), Lq=1, Lkv=2 ---
    # q scale (1/sqrt(H)) is already folded into w_attn[:, 0:H] and b_vec[1, 0:H].
    q = jnp.dot(e0, w_attn[:, 0:H], preferred_element_type=f32) + b_vec[1:2, 0:H]     # (B, H)
    kv = (jnp.dot(ekv, w_attn[:, H:3 * H], preferred_element_type=f32)
          + b_vec[1:2, H:3 * H])                                                      # (2B, 2H)
    k = kv[:, 0:H]          # rows 0:B -> key 1, rows B:2B -> key 2
    v = kv[:, H:2 * H]

    qq = jnp.concatenate([q, q], axis=0)                    # (2B, H)
    s = jnp.sum(qq * k, axis=-1, keepdims=True)             # (2B, 1): both scores, one reduce
    s1, s2 = s[0:B], s[B:2 * B]
    m = jnp.maximum(s1, s2)
    p1 = jnp.exp(s1 - m)
    p2 = jnp.exp(s2 - m)
    inv = pl.reciprocal(p1 + p2, approx=True)               # EUP, off the VALU path
    attn = (p1 * inv) * v[0:B] + (p2 * inv) * v[B:2 * B]    # (B, H)
    fused = (jnp.dot(attn, w_attn[:, 3 * H:4 * H], preferred_element_type=f32)
             + b_vec[2:3, 0:H])                             # out_proj

    # --- residual blocks, training-mode BatchNorm1d (biased variance) ---
    def batchnorm(h, gamma, beta):
        mean = jnp.mean(h, axis=0, keepdims=True)
        msq = jnp.mean(h * h, axis=0, keepdims=True)
        var = msq - mean * mean                             # biased variance, E[h^2]-E[h]^2
        a = gamma * jax.lax.rsqrt(var + BN_EPS)
        b = beta - mean * a
        return h * a + b

    h = fused
    for i in range(n_blocks):  # static unroll; n_blocks is compile-time known and small
        row1 = b_vec[3 + 2 * i:4 + 2 * i, :]    # [fc1b | bn1_gamma | bn1_beta]
        row2 = b_vec[4 + 2 * i:5 + 2 * i, :]    # [fc2b | bn2_gamma | bn2_beta]
        identity = h
        o = (jnp.dot(h, wblk_ref[i, :, 0:H], preferred_element_type=f32)
             + row1[:, 0:H])
        o = jnp.maximum(batchnorm(o, row1[:, H:2 * H], row1[:, 2 * H:3 * H]), 0.0)
        o = (jnp.dot(o, wblk_ref[i, :, H:2 * H], preferred_element_type=f32)
             + row2[:, 0:H])
        o = batchnorm(o, row2[:, H:2 * H], row2[:, 2 * H:3 * H])
        h = jnp.maximum(o + identity, 0.0)

    # --- classifier ---
    out_ref[...] = (jnp.dot(h, w_attn[:, 4 * H:4 * H + C], preferred_element_type=f32)
                    + b_vec[2:3, H:H + C]).astype(out_ref.dtype)


def pack_params(params, feat_dims, hidden_dim, num_classes, n_blocks):
    """Host-side packing of the 26 small parameter arrays into 4 buffers."""
    H = hidden_dim
    C = num_classes
    d0, d1, d2 = feat_dims
    Dtot = d0 + d1 + d2
    scale = 1.0 / math.sqrt(H)   # single head => head_dim == H
    assert C <= 2 * H, "classifier bias packing assumes num_classes <= 2*hidden_dim"

    f32 = jnp.float32
    # Block-diagonal projection weight: x_cat (B, Dtot) @ w_proj -> [e0 | e1 | e2] pre-ReLU.
    w_proj = jnp.zeros((Dtot, 3 * H), f32)
    w_proj = w_proj.at[0:d0, 0:H].set(params["pw0"])
    w_proj = w_proj.at[d0:d0 + d1, H:2 * H].set(params["pw1"])
    w_proj = w_proj.at[d0 + d1:Dtot, 2 * H:3 * H].set(params["pw2"])

    # All (H, .) weights in one buffer; q scale folded into wq.
    w_attn = jnp.concatenate(
        [params["wq"] * scale, params["wk"], params["wv"], params["wo"], params["wc"]],
        axis=1).astype(f32)                                     # (H, 4H + C)

    # Residual-block weights: [fc1w | fc2w] along the last axis.
    w_blocks = jnp.concatenate([params["fc1w"], params["fc2w"]], axis=-1).astype(f32)

    # Bias / BN rows, each row is width 3H.
    row0 = jnp.concatenate([params["pb0"], params["pb1"], params["pb2"]], axis=1)
    row1 = jnp.concatenate([params["bq"] * scale, params["bk"], params["bv"]], axis=1)
    row2 = jnp.concatenate(
        [params["bo"], params["bc"], jnp.zeros((1, 2 * H - C), f32)], axis=1)
    rows = [row0, row1, row2]
    for i in range(n_blocks):
        rows.append(jnp.concatenate(
            [params["fc1b"][i], params["bn1g"][i], params["bn1b"][i]], axis=1))
        rows.append(jnp.concatenate(
            [params["fc2b"][i], params["bn2g"][i], params["bn2b"][i]], axis=1))
    b_vec = jnp.concatenate(rows, axis=0).astype(f32)           # (3 + 2*n_blocks, 3H)

    return w_proj, w_attn, w_blocks, b_vec


def attention_resnet(packed, x0, tf, mir):
    """Whole-array VMEM blocks (everything is tiny), no grid needed."""
    w_proj, w_attn, w_blocks, b_vec = packed
    x_cat = jnp.concatenate([x0, tf, mir], axis=1)
    B = x0.shape[0]
    H = w_proj.shape[1] // 3
    C = w_attn.shape[1] - 4 * H
    return pl.pallas_call(
        attention_resnet_kernel,
        out_shape=jax.ShapeDtypeStruct((B, C), jnp.float32),
    )(x_cat, w_proj, w_attn, w_blocks, b_vec)


def init_params(key, feat_dims, hidden_dim, num_classes, n_blocks):
    ks = iter(jax.random.split(key, 64))

    def rnd(shape, scale=0.1):
        return (scale * jax.random.normal(next(ks), shape)).astype(jnp.float32)

    H = hidden_dim
    d0, d1, d2 = feat_dims
    return {
        # projections (weights stored as (in, out))
        "pw0": rnd((d0, H)), "pb0": rnd((1, H)),
        "pw1": rnd((d1, H)), "pb1": rnd((1, H)),
        "pw2": rnd((d2, H)), "pb2": rnd((1, H)),
        # multi-head attention (single head): in_proj split into q/k/v + out_proj
        "wq": rnd((H, H)), "bq": rnd((1, H)),
        "wk": rnd((H, H)), "bk": rnd((1, H)),
        "wv": rnd((H, H)), "bv": rnd((1, H)),
        "wo": rnd((H, H)), "bo": rnd((1, H)),
        # residual blocks (stacked along leading n_blocks axis)
        "fc1w": rnd((n_blocks, H, H)), "fc1b": rnd((n_blocks, 1, H)),
        "bn1g": 1.0 + rnd((n_blocks, 1, H)), "bn1b": rnd((n_blocks, 1, H)),
        "fc2w": rnd((n_blocks, H, H)), "fc2b": rnd((n_blocks, 1, H)),
        "bn2g": 1.0 + rnd((n_blocks, 1, H)), "bn2b": rnd((n_blocks, 1, H)),
        # classifier
        "wc": rnd((H, num_classes)), "bc": rnd((1, num_classes)),
    }


if __name__ == "__main__":
    # Small shapes consistent with the module: select = [True, True, True]
    B = 8
    feat_dims = [32, 16, 24]
    hidden_dim = 32
    num_classes = 4
    n_blocks = 2

    key = jax.random.PRNGKey(0)
    kp, k0, k1, k2 = jax.random.split(key, 4)
    params = init_params(kp, feat_dims, hidden_dim, num_classes, n_blocks)
    packed = pack_params(params, feat_dims, hidden_dim, num_classes, n_blocks)

    x0 = jax.random.normal(k0, (B, feat_dims[0]), dtype=jnp.float32)
    tf = jax.random.normal(k1, (B, feat_dims[1]), dtype=jnp.float32)
    mir = jax.random.normal(k2, (B, feat_dims[2]), dtype=jnp.float32)

    out = attention_resnet(packed, x0, tf, mir)
    jax.block_until_ready(out)
    assert out.shape == (B, num_classes) and out.dtype == jnp.float32
    assert bool(jnp.all(jnp.isfinite(out)))
    print("KERNEL_OK")
</pallas_src>

<mosaic_0001>
module attributes {stable_mosaic.version = 11 : i64} {
  func.func @attention_resnet_kernel(%arg0: memref<8x72xf32, #tpu.memory_space<vmem>>, %arg1: memref<72x96xf32, #tpu.memory_space<vmem>>, %arg2: memref<32x132xf32, #tpu.memory_space<vmem>>, %arg3: memref<2x32x64xf32, #tpu.memory_space<vmem>>, %arg4: memref<7x96xf32, #tpu.memory_space<vmem>>, %arg5: memref<8x4xf32, #tpu.memory_space<vmem>>) attributes {dimension_semantics = [], scalar_prefetch = 0 : i64, scratch_operands = 0 : i64, tpu.core_type = #tpu.core_type<tc>} {
    %c0 = arith.constant 0 : index
    %c0_0 = arith.constant 0 : index
    %0 = vector.load %arg0[%c0, %c0_0] : memref<8x72xf32, #tpu.memory_space<vmem>>, vector<8x72xf32>
    %c0_1 = arith.constant 0 : index
    %c0_2 = arith.constant 0 : index
    %1 = vector.load %arg1[%c0_1, %c0_2] : memref<72x96xf32, #tpu.memory_space<vmem>>, vector<72x96xf32>
    %c0_3 = arith.constant 0 : index
    %c0_4 = arith.constant 0 : index
    %2 = vector.load %arg2[%c0_3, %c0_4] : memref<32x132xf32, #tpu.memory_space<vmem>>, vector<32x132xf32>
    %c0_5 = arith.constant 0 : index
    %c0_6 = arith.constant 0 : index
    %3 = vector.load %arg4[%c0_5, %c0_6] : memref<7x96xf32, #tpu.memory_space<vmem>>, vector<7x96xf32>
    %cst = arith.constant dense<0.000000e+00> : vector<8x96xf32>
    %4 = tpu.matmul %0, %1, %cst {dimension_numbers = #tpu.dot_dimension_numbers<[1], [0], [0], [1], [0, 0, 1, 1], [], []>} : vector<8x72xf32>, vector<72x96xf32>, vector<8x96xf32> -> vector<8x96xf32>
    %5 = vector.extract_strided_slice %3 {offsets = [0, 0], sizes = [1, 96], strides = [1, 1]} : vector<7x96xf32> to vector<1x96xf32>
    %6 = vector.broadcast %5 : vector<1x96xf32> to vector<8x96xf32>
    %7 = arith.addf %4, %6 : vector<8x96xf32>
    %cst_7 = arith.constant 0.000000e+00 : f32
    %8 = vector.broadcast %cst_7 : f32 to vector<8x96xf32>
    %9 = arith.maximumf %7, %8 : vector<8x96xf32>
    %10 = vector.extract_strided_slice %9 {offsets = [0, 0], sizes = [8, 32], strides = [1, 1]} : vector<8x96xf32> to vector<8x32xf32>
    %11 = vector.extract_strided_slice %9 {offsets = [0, 32], sizes = [8, 32], strides = [1, 1]} : vector<8x96xf32> to vector<8x32xf32>
    %12 = vector.extract_strided_slice %9 {offsets = [0, 64], sizes = [8, 32], strides = [1, 1]} : vector<8x96xf32> to vector<8x32xf32>
    %13 = tpu.concatenate %11, %12 in 0 : vector<8x32xf32>, vector<8x32xf32> -> vector<16x32xf32>
    %14 = vector.extract_strided_slice %2 {offsets = [0, 0], sizes = [32, 32], strides = [1, 1]} : vector<32x132xf32> to vector<32x32xf32>
    %cst_8 = arith.constant dense<0.000000e+00> : vector<8x32xf32>
    %15 = tpu.matmul %10, %14, %cst_8 {dimension_numbers = #tpu.dot_dimension_numbers<[1], [0], [0], [1], [0, 0, 1, 1], [], []>} : vector<8x32xf32>, vector<32x32xf32>, vector<8x32xf32> -> vector<8x32xf32>
    %16 = vector.extract_strided_slice %3 {offsets = [1, 0], sizes = [1, 32], strides = [1, 1]} : vector<7x96xf32> to vector<1x32xf32>
    %17 = vector.broadcast %16 : vector<1x32xf32> to vector<8x32xf32>
    %18 = arith.addf %15, %17 : vector<8x32xf32>
    %19 = vector.extract_strided_slice %2 {offsets = [0, 32], sizes = [32, 64], strides = [1, 1]} : vector<32x132xf32> to vector<32x64xf32>
    %cst_9 = arith.constant dense<0.000000e+00> : vector<16x64xf32>
    %20 = tpu.matmul %13, %19, %cst_9 {dimension_numbers = #tpu.dot_dimension_numbers<[1], [0], [0], [1], [0, 0, 1, 1], [], []>} : vector<16x32xf32>, vector<32x64xf32>, vector<16x64xf32> -> vector<16x64xf32>
    %21 = vector.extract_strided_slice %3 {offsets = [1, 32], sizes = [1, 64], strides = [1, 1]} : vector<7x96xf32> to vector<1x64xf32>
    %22 = vector.broadcast %21 : vector<1x64xf32> to vector<16x64xf32>
    %23 = arith.addf %20, %22 : vector<16x64xf32>
    %24 = vector.extract_strided_slice %23 {offsets = [0, 0], sizes = [16, 32], strides = [1, 1]} : vector<16x64xf32> to vector<16x32xf32>
    %25 = vector.extract_strided_slice %23 {offsets = [0, 32], sizes = [16, 32], strides = [1, 1]} : vector<16x64xf32> to vector<16x32xf32>
    %26 = tpu.concatenate %18, %18 in 0 : vector<8x32xf32>, vector<8x32xf32> -> vector<16x32xf32>
    %27 = arith.mulf %26, %24 : vector<16x32xf32>
    %cst_10 = arith.constant dense<0.000000e+00> : vector<16xf32>
    %28 = vector.multi_reduction <add>, %27, %cst_10 [1] : vector<16x32xf32> to vector<16xf32>
    %29 = vector.shape_cast %28 : vector<16xf32> to vector<16x1xf32>
    %30 = vector.extract_strided_slice %29 {offsets = [0, 0], sizes = [8, 1], strides = [1, 1]} : vector<16x1xf32> to vector<8x1xf32>
    %31 = vector.extract_strided_slice %29 {offsets = [8, 0], sizes = [8, 1], strides = [1, 1]} : vector<16x1xf32> to vector<8x1xf32>
    %32 = arith.maximumf %30, %31 : vector<8x1xf32>
    %33 = arith.subf %30, %32 : vector<8x1xf32>
    %34 = math.exp %33 : vector<8x1xf32>
    %35 = arith.subf %31, %32 : vector<8x1xf32>
    %36 = math.exp %35 : vector<8x1xf32>
    %37 = arith.addf %34, %36 : vector<8x1xf32>
    %38 = tpu.reciprocal %37 {approx = true} : vector<8x1xf32> -> vector<8x1xf32>
    %39 = arith.mulf %34, %38 : vector<8x1xf32>
    %40 = vector.extract_strided_slice %25 {offsets = [0, 0], sizes = [8, 32], strides = [1, 1]} : vector<16x32xf32> to vector<8x32xf32>
    %41 = vector.broadcast %39 : vector<8x1xf32> to vector<8x32xf32>
    %42 = arith.mulf %41, %40 : vector<8x32xf32>
    %43 = arith.mulf %36, %38 : vector<8x1xf32>
    %44 = vector.extract_strided_slice %25 {offsets = [8, 0], sizes = [8, 32], strides = [1, 1]} : vector<16x32xf32> to vector<8x32xf32>
    %45 = vector.broadcast %43 : vector<8x1xf32> to vector<8x32xf32>
    %46 = arith.mulf %45, %44 : vector<8x32xf32>
    %47 = arith.addf %42, %46 : vector<8x32xf32>
    %48 = vector.extract_strided_slice %2 {offsets = [0, 96], sizes = [32, 32], strides = [1, 1]} : vector<32x132xf32> to vector<32x32xf32>
    %cst_11 = arith.constant dense<0.000000e+00> : vector<8x32xf32>
    %49 = tpu.matmul %47, %48, %cst_11 {dimension_numbers = #tpu.dot_dimension_numbers<[1], [0], [0], [1], [0, 0, 1, 1], [], []>} : vector<8x32xf32>, vector<32x32xf32>, vector<8x32xf32> -> vector<8x32xf32>
    %50 = vector.extract_strided_slice %3 {offsets = [2, 0], sizes = [1, 32], strides = [1, 1]} : vector<7x96xf32> to vector<1x32xf32>
    %51 = vector.broadcast %50 : vector<1x32xf32> to vector<8x32xf32>
    %52 = arith.addf %49, %51 : vector<8x32xf32>
    %53 = vector.extract_strided_slice %3 {offsets = [3, 0], sizes = [1, 96], strides = [1, 1]} : vector<7x96xf32> to vector<1x96xf32>
    %54 = vector.extract_strided_slice %3 {offsets = [4, 0], sizes = [1, 96], strides = [1, 1]} : vector<7x96xf32> to vector<1x96xf32>
    %c0_12 = arith.constant 0 : index
    %c0_13 = arith.constant 0 : index
    %c0_14 = arith.constant 0 : index
    %55 = vector.load %arg3[%c0_12, %c0_13, %c0_14] : memref<2x32x64xf32, #tpu.memory_space<vmem>>, vector<1x32x32xf32>
    %56 = vector.shape_cast %55 : vector<1x32x32xf32> to vector<32x32xf32>
    %cst_15 = arith.constant dense<0.000000e+00> : vector<8x32xf32>
    %57 = tpu.matmul %52, %56, %cst_15 {dimension_numbers = #tpu.dot_dimension_numbers<[1], [0], [0], [1], [0, 0, 1, 1], [], []>} : vector<8x32xf32>, vector<32x32xf32>, vector<8x32xf32> -> vector<8x32xf32>
    %58 = vector.extract_strided_slice %53 {offsets = [0, 0], sizes = [1, 32], strides = [1, 1]} : vector<1x96xf32> to vector<1x32xf32>
    %59 = vector.broadcast %58 : vector<1x32xf32> to vector<8x32xf32>
    %60 = arith.addf %57, %59 : vector<8x32xf32>
    %61 = vector.extract_strided_slice %53 {offsets = [0, 32], sizes = [1, 32], strides = [1, 1]} : vector<1x96xf32> to vector<1x32xf32>
    %62 = vector.extract_strided_slice %53 {offsets = [0, 64], sizes = [1, 32], strides = [1, 1]} : vector<1x96xf32> to vector<1x32xf32>
    %cst_16 = arith.constant dense<0.000000e+00> : vector<32xf32>
    %63 = vector.multi_reduction <add>, %60, %cst_16 [0] : vector<8x32xf32> to vector<32xf32>
    %64 = vector.shape_cast %63 : vector<32xf32> to vector<1x32xf32>
    %cst_17 = arith.constant 8.000000e+00 : f32
    %65 = vector.broadcast %cst_17 : f32 to vector<1x32xf32>
    %66 = arith.divf %64, %65 : vector<1x32xf32>
    %67 = arith.mulf %60, %60 : vector<8x32xf32>
    %cst_18 = arith.constant dense<0.000000e+00> : vector<32xf32>
    %68 = vector.multi_reduction <add>, %67, %cst_18 [0] : vector<8x32xf32> to vector<32xf32>
    %69 = vector.shape_cast %68 : vector<32xf32> to vector<1x32xf32>
    %cst_19 = arith.constant 8.000000e+00 : f32
    %70 = vector.broadcast %cst_19 : f32 to vector<1x32xf32>
    %71 = arith.divf %69, %70 : vector<1x32xf32>
    %72 = arith.mulf %66, %66 : vector<1x32xf32>
    %73 = arith.subf %71, %72 : vector<1x32xf32>
    %cst_20 = arith.constant 9.99999974E-6 : f32
    %74 = vector.broadcast %cst_20 : f32 to vector<1x32xf32>
    %75 = arith.addf %73, %74 : vector<1x32xf32>
    %76 = math.rsqrt %75 : vector<1x32xf32>
    %77 = arith.mulf %61, %76 : vector<1x32xf32>
    %78 = arith.mulf %66, %77 : vector<1x32xf32>
    %79 = arith.subf %62, %78 : vector<1x32xf32>
    %80 = vector.broadcast %77 : vector<1x32xf32> to vector<8x32xf32>
    %81 = arith.mulf %60, %80 : vector<8x32xf32>
    %82 = vector.broadcast %79 : vector<1x32xf32> to vector<8x32xf32>
    %83 = arith.addf %81, %82 : vector<8x32xf32>
    %cst_21 = arith.constant 0.000000e+00 : f32
    %84 = vector.broadcast %cst_21 : f32 to vector<8x32xf32>
    %85 = arith.maximumf %83, %84 : vector<8x32xf32>
    %c0_22 = arith.constant 0 : index
    %c0_23 = arith.constant 0 : index
    %c32 = arith.constant 32 : index
    %86 = vector.load %arg3[%c0_22, %c0_23, %c32] : memref<2x32x64xf32, #tpu.memory_space<vmem>>, vector<1x32x32xf32>
    %87 = vector.shape_cast %86 : vector<1x32x32xf32> to vector<32x32xf32>
    %cst_24 = arith.constant dense<0.000000e+00> : vector<8x32xf32>
    %88 = tpu.matmul %85, %87, %cst_24 {dimension_numbers = #tpu.dot_dimension_numbers<[1], [0], [0], [1], [0, 0, 1, 1], [], []>} : vector<8x32xf32>, vector<32x32xf32>, vector<8x32xf32> -> vector<8x32xf32>
    %89 = vector.extract_strided_slice %54 {offsets = [0, 0], sizes = [1, 32], strides = [1, 1]} : vector<1x96xf32> to vector<1x32xf32>
    %90 = vector.broadcast %89 : vector<1x32xf32> to vector<8x32xf32>
    %91 = arith.addf %88, %90 : vector<8x32xf32>
    %92 = vector.extract_strided_slice %54 {offsets = [0, 32], sizes = [1, 32], strides = [1, 1]} : vector<1x96xf32> to vector<1x32xf32>
    %93 = vector.extract_strided_slice %54 {offsets = [0, 64], sizes = [1, 32], strides = [1, 1]} : vector<1x96xf32> to vector<1x32xf32>
    %cst_25 = arith.constant dense<0.000000e+00> : vector<32xf32>
    %94 = vector.multi_reduction <add>, %91, %cst_25 [0] : vector<8x32xf32> to vector<32xf32>
    %95 = vector.shape_cast %94 : vector<32xf32> to vector<1x32xf32>
    %cst_26 = arith.constant 8.000000e+00 : f32
    %96 = vector.broadcast %cst_26 : f32 to vector<1x32xf32>
    %97 = arith.divf %95, %96 : vector<1x32xf32>
    %98 = arith.mulf %91, %91 : vector<8x32xf32>
    %cst_27 = arith.constant dense<0.000000e+00> : vector<32xf32>
    %99 = vector.multi_reduction <add>, %98, %cst_27 [0] : vector<8x32xf32> to vector<32xf32>
    %100 = vector.shape_cast %99 : vector<32xf32> to vector<1x32xf32>
    %cst_28 = arith.constant 8.000000e+00 : f32
    %101 = vector.broadcast %cst_28 : f32 to vector<1x32xf32>
    %102 = arith.divf %100, %101 : vector<1x32xf32>
    %103 = arith.mulf %97, %97 : vector<1x32xf32>
    %104 = arith.subf %102, %103 : vector<1x32xf32>
    %cst_29 = arith.constant 9.99999974E-6 : f32
    %105 = vector.broadcast %cst_29 : f32 to vector<1x32xf32>
    %106 = arith.addf %104, %105 : vector<1x32xf32>
    %107 = math.rsqrt %106 : vector<1x32xf32>
    %108 = arith.mulf %92, %107 : vector<1x32xf32>
    %109 = arith.mulf %97, %108 : vector<1x32xf32>
    %110 = arith.subf %93, %109 : vector<1x32xf32>
    %111 = vector.broadcast %108 : vector<1x32xf32> to vector<8x32xf32>
    %112 = arith.mulf %91, %111 : vector<8x32xf32>
    %113 = vector.broadcast %110 : vector<1x32xf32> to vector<8x32xf32>
    %114 = arith.addf %112, %113 : vector<8x32xf32>
    %115 = arith.addf %114, %52 : vector<8x32xf32>
    %cst_30 = arith.constant 0.000000e+00 : f32
    %116 = vector.broadcast %cst_30 : f32 to vector<8x32xf32>
    %117 = arith.maximumf %115, %116 : vector<8x32xf32>
    %118 = vector.extract_strided_slice %3 {offsets = [5, 0], sizes = [1, 96], strides = [1, 1]} : vector<7x96xf32> to vector<1x96xf32>
    %119 = vector.extract_strided_slice %3 {offsets = [6, 0], sizes = [1, 96], strides = [1, 1]} : vector<7x96xf32> to vector<1x96xf32>
    %c1 = arith.constant 1 : index
    %c0_31 = arith.constant 0 : index
    %c0_32 = arith.constant 0 : index
    %120 = vector.load %arg3[%c1, %c0_31, %c0_32] : memref<2x32x64xf32, #tpu.memory_space<vmem>>, vector<1x32x32xf32>
    %121 = vector.shape_cast %120 : vector<1x32x32xf32> to vector<32x32xf32>
    %cst_33 = arith.constant dense<0.000000e+00> : vector<8x32xf32>
    %122 = tpu.matmul %117, %121, %cst_33 {dimension_numbers = #tpu.dot_dimension_numbers<[1], [0], [0], [1], [0, 0, 1, 1], [], []>} : vector<8x32xf32>, vector<32x32xf32>, vector<8x32xf32> -> vector<8x32xf32>
    %123 = vector.extract_strided_slice %118 {offsets = [0, 0], sizes = [1, 32], strides = [1, 1]} : vector<1x96xf32> to vector<1x32xf32>
    %124 = vector.broadcast %123 : vector<1x32xf32> to vector<8x32xf32>
    %125 = arith.addf %122, %124 : vector<8x32xf32>
    %126 = vector.extract_strided_slice %118 {offsets = [0, 32], sizes = [1, 32], strides = [1, 1]} : vector<1x96xf32> to vector<1x32xf32>
    %127 = vector.extract_strided_slice %118 {offsets = [0, 64], sizes = [1, 32], strides = [1, 1]} : vector<1x96xf32> to vector<1x32xf32>
    %cst_34 = arith.constant dense<0.000000e+00> : vector<32xf32>
    %128 = vector.multi_reduction <add>, %125, %cst_34 [0] : vector<8x32xf32> to vector<32xf32>
    %129 = vector.shape_cast %128 : vector<32xf32> to vector<1x32xf32>
    %cst_35 = arith.constant 8.000000e+00 : f32
    %130 = vector.broadcast %cst_35 : f32 to vector<1x32xf32>
    %131 = arith.divf %129, %130 : vector<1x32xf32>
    %132 = arith.mulf %125, %125 : vector<8x32xf32>
    %cst_36 = arith.constant dense<0.000000e+00> : vector<32xf32>
    %133 = vector.multi_reduction <add>, %132, %cst_36 [0] : vector<8x32xf32> to vector<32xf32>
    %134 = vector.shape_cast %133 : vector<32xf32> to vector<1x32xf32>
    %cst_37 = arith.constant 8.000000e+00 : f32
    %135 = vector.broadcast %cst_37 : f32 to vector<1x32xf32>
    %136 = arith.divf %134, %135 : vector<1x32xf32>
    %137 = arith.mulf %131, %131 : vector<1x32xf32>
    %138 = arith.subf %136, %137 : vector<1x32xf32>
    %cst_38 = arith.constant 9.99999974E-6 : f32
    %139 = vector.broadcast %cst_38 : f32 to vector<1x32xf32>
    %140 = arith.addf %138, %139 : vector<1x32xf32>
    %141 = math.rsqrt %140 : vector<1x32xf32>
    %142 = arith.mulf %126, %141 : vector<1x32xf32>
    %143 = arith.mulf %131, %142 : vector<1x32xf32>
    %144 = arith.subf %127, %143 : vector<1x32xf32>
    %145 = vector.broadcast %142 : vector<1x32xf32> to vector<8x32xf32>
    %146 = arith.mulf %125, %145 : vector<8x32xf32>
    %147 = vector.broadcast %144 : vector<1x32xf32> to vector<8x32xf32>
    %148 = arith.addf %146, %147 : vector<8x32xf32>
    %cst_39 = arith.constant 0.000000e+00 : f32
    %149 = vector.broadcast %cst_39 : f32 to vector<8x32xf32>
    %150 = arith.maximumf %148, %149 : vector<8x32xf32>
    %c1_40 = arith.constant 1 : index
    %c0_41 = arith.constant 0 : index
    %c32_42 = arith.constant 32 : index
    %151 = vector.load %arg3[%c1_40, %c0_41, %c32_42] : memref<2x32x64xf32, #tpu.memory_space<vmem>>, vector<1x32x32xf32>
    %152 = vector.shape_cast %151 : vector<1x32x32xf32> to vector<32x32xf32>
    %cst_43 = arith.constant dense<0.000000e+00> : vector<8x32xf32>
    %153 = tpu.matmul %150, %152, %cst_43 {dimension_numbers = #tpu.dot_dimension_numbers<[1], [0], [0], [1], [0, 0, 1, 1], [], []>} : vector<8x32xf32>, vector<32x32xf32>, vector<8x32xf32> -> vector<8x32xf32>
    %154 = vector.extract_strided_slice %119 {offsets = [0, 0], sizes = [1, 32], strides = [1, 1]} : vector<1x96xf32> to vector<1x32xf32>
    %155 = vector.broadcast %154 : vector<1x32xf32> to vector<8x32xf32>
    %156 = arith.addf %153, %155 : vector<8x32xf32>
    %157 = vector.extract_strided_slice %119 {offsets = [0, 32], sizes = [1, 32], strides = [1, 1]} : vector<1x96xf32> to vector<1x32xf32>
    %158 = vector.extract_strided_slice %119 {offsets = [0, 64], sizes = [1, 32], strides = [1, 1]} : vector<1x96xf32> to vector<1x32xf32>
    %cst_44 = arith.constant dense<0.000000e+00> : vector<32xf32>
    %159 = vector.multi_reduction <add>, %156, %cst_44 [0] : vector<8x32xf32> to vector<32xf32>
    %160 = vector.shape_cast %159 : vector<32xf32> to vector<1x32xf32>
    %cst_45 = arith.constant 8.000000e+00 : f32
    %161 = vector.broadcast %cst_45 : f32 to vector<1x32xf32>
    %162 = arith.divf %160, %161 : vector<1x32xf32>
    %163 = arith.mulf %156, %156 : vector<8x32xf32>
    %cst_46 = arith.constant dense<0.000000e+00> : vector<32xf32>
    %164 = vector.multi_reduction <add>, %163, %cst_46 [0] : vector<8x32xf32> to vector<32xf32>
    %165 = vector.shape_cast %164 : vector<32xf32> to vector<1x32xf32>
    %cst_47 = arith.constant 8.000000e+00 : f32
    %166 = vector.broadcast %cst_47 : f32 to vector<1x32xf32>
    %167 = arith.divf %165, %166 : vector<1x32xf32>
    %168 = arith.mulf %162, %162 : vector<1x32xf32>
    %169 = arith.subf %167, %168 : vector<1x32xf32>
    %cst_48 = arith.constant 9.99999974E-6 : f32
    %170 = vector.broadcast %cst_48 : f32 to vector<1x32xf32>
    %171 = arith.addf %169, %170 : vector<1x32xf32>
    %172 = math.rsqrt %171 : vector<1x32xf32>
    %173 = arith.mulf %157, %172 : vector<1x32xf32>
    %174 = arith.mulf %162, %173 : vector<1x32xf32>
    %175 = arith.subf %158, %174 : vector<1x32xf32>
    %176 = vector.broadcast %173 : vector<1x32xf32> to vector<8x32xf32>
    %177 = arith.mulf %156, %176 : vector<8x32xf32>
    %178 = vector.broadcast %175 : vector<1x32xf32> to vector<8x32xf32>
    %179 = arith.addf %177, %178 : vector<8x32xf32>
    %180 = arith.addf %179, %117 : vector<8x32xf32>
    %cst_49 = arith.constant 0.000000e+00 : f32
    %181 = vector.broadcast %cst_49 : f32 to vector<8x32xf32>
    %182 = arith.maximumf %180, %181 : vector<8x32xf32>
    %183 = vector.extract_strided_slice %2 {offsets = [0, 128], sizes = [32, 4], strides = [1, 1]} : vector<32x132xf32> to vector<32x4xf32>
    %cst_50 = arith.constant dense<0.000000e+00> : vector<8x4xf32>
    %184 = tpu.matmul %182, %183, %cst_50 {dimension_numbers = #tpu.dot_dimension_numbers<[1], [0], [0], [1], [0, 0, 1, 1], [], []>} : vector<8x32xf32>, vector<32x4xf32>, vector<8x4xf32> -> vector<8x4xf32>
    %185 = vector.extract_strided_slice %3 {offsets = [2, 32], sizes = [1, 4], strides = [1, 1]} : vector<7x96xf32> to vector<1x4xf32>
    %186 = vector.broadcast %185 : vector<1x4xf32> to vector<8x4xf32>
    %187 = arith.addf %184, %186 : vector<8x4xf32>
    %c0_51 = arith.constant 0 : index
    %c0_52 = arith.constant 0 : index
    %188 = vector.load %arg5[%c0_51, %c0_52] : memref<8x4xf32, #tpu.memory_space<vmem>>, vector<8x4xf32>
    tpu.vector_store %arg5[%c0_51, %c0_52], %187 {strides = array<i32>} : memref<8x4xf32, #tpu.memory_space<vmem>>, vector<8x4xf32>,
    return
  }
}

</mosaic_0001>

<llo_original>
// kernel: tpu_custom_call.1
$region0: #{tpu_custom_call.1}
  #allocation0 [shape = 'u32[]', space=smem, size = 0x4, offset = 0x4, fixed_abs, tag = 'smem constant byte address 0x4 - core index']
  #allocation1 [shape = 'u32[72,128]{1,0:T(1,128)}', space=vmem, size = 0x9000, scoped, tag = 'internal scratch']
  %s0 = inlined_call_operand.hbm [shape: f32[8,72], index: 0, kind: input, shape index: {}]
  %s1 = inlined_call_operand.hbm [shape: f32[72,96], index: 1, kind: input, shape index: {}]
  %s2 = inlined_call_operand.hbm [shape: f32[32,132], index: 2, kind: input, shape index: {}]
  %s3 = inlined_call_operand.hbm [shape: f32[2,32,64], index: 3, kind: input, shape index: {}]
  %s4 = inlined_call_operand.hbm [shape: f32[7,96], index: 4, kind: input, shape index: {}]
  %s5 = inlined_call_operand.vmem [shape: f32[8,4], index: 5, kind: output, shape index: {}]
  %s6 = sld [smem:[#allocation0]]
  $region50: #{tpu_custom_call.1} parent=0
    _
  %s8 = ssub.s32 1, %s6
  %s9 = scalar_select 0, %s8, %s6
  $region1: #{tpu_custom_call.1} parent=0
    #allocation2 [shape = 'u8[4096]{0}', space=vmem, size = 0x1000, scoped, tag = 'input window, operand 0, single buffered']
    #allocation3 [shape = 's32[1]{0}', space=sflag, size = 0x4, scoped, tag = 'scoped memory for tpu_custom_call.1']
    #allocation4 [shape = 'u8[36864]{0}', space=vmem, size = 0x9000, scoped, tag = 'input window, operand 1, single buffered']
    #allocation5 [shape = 's32[1]{0}', space=sflag, size = 0x4, scoped, tag = 'scoped memory for tpu_custom_call.1']
    #allocation6 [shape = 'u8[32768]{0}', space=vmem, size = 0x8000, scoped, tag = 'input window, operand 2, single buffered']
    #allocation7 [shape = 'u8[32768]{0}', space=vmem, size = 0x8000, scoped, tag = 'input window, operand 3, single buffered']
    #allocation8 [shape = 's32[1]{0}', space=sflag, size = 0x4, scoped, tag = 'scoped memory for tpu_custom_call.1']
    #allocation9 [shape = 'u8[4096]{0}', space=vmem, size = 0x1000, scoped, tag = 'input window, operand 4, single buffered']
    %10 = vsyncpa [#allocation3], 0
    %11 = vsyncpa [#allocation5], 0
    %12 = vsyncpa [#allocation8], 0
    // Predicated region
    $region2: #{tpu_custom_call.1} parent=1 // pred_check
      _
    $region3: #{tpu_custom_call.1} parent=1 // pred_check_branch
      %14 = sbr.rel (0) target = $region5
    $region4: #{tpu_custom_call.1} parent=1 // pred_region
      %16 = vsyncadd [#allocation3], 0
      %s18 = sshll.u32 %s0, 4
      %s19 = int_to_ptr.hbm [resolvable:$true] %s18
      %s20 = sshll.u32 [#allocation2], 4
      %s21 = int_to_ptr.vmem [resolvable:$true] %s20
      %23 = dma.hbm_to_vmem [thread:$0]  %s19, 128, %s21, [#allocation3]
    $region5: #{tpu_custom_call.1} parent=1 // pred_fallthru
      _
    // Predicated region
    $region6: #{tpu_custom_call.1} parent=1 // pred_check
      _
    $region7: #{tpu_custom_call.1} parent=1 // pred_check_branch
      %25 = sbr.rel (0) target = $region9
    $region8: #{tpu_custom_call.1} parent=1 // pred_region
      %27 = vsyncadd [#allocation5], 0
      %s28 = sshll.u32 %s1, 4
      %s29 = int_to_ptr.hbm [resolvable:$true] %s28
      %s30 = sshll.u32 [#allocation4], 4
      %s31 = int_to_ptr.vmem [resolvable:$true] %s30
      %36 = dma.hbm_to_vmem [thread:$0]  %s29, 1152, %s31, [#allocation5], 128, 128, 8
    $region9: #{tpu_custom_call.1} parent=1 // pred_fallthru
      _
    // Predicated region
    $region10: #{tpu_custom_call.1} parent=1 // pred_check
      _
    $region11: #{tpu_custom_call.1} parent=1 // pred_check_branch
      %38 = sbr.rel (0) target = $region13
    $region12: #{tpu_custom_call.1} parent=1 // pred_region
      %40 = vsyncadd [#allocation5], 0
      %s41 = sshll.u32 %s2, 4
      %s42 = int_to_ptr.hbm [resolvable:$true] %s41
      %s43 = sshll.u32 [#allocation6], 4
      %s44 = int_to_ptr.vmem [resolvable:$true] %s43
      %49 = dma.hbm_to_vmem [thread:$0]  %s42, 1024, %s44, [#allocation5], 256, 256, 16
    $region13: #{tpu_custom_call.1} parent=1 // pred_fallthru
      _
    // Predicated region
    $region14: #{tpu_custom_call.1} parent=1 // pred_check
      _
    $region15: #{tpu_custom_call.1} parent=1 // pred_check_branch
      %51 = sbr.rel (0) target = $region17
    $region16: #{tpu_custom_call.1} parent=1 // pred_region
      %53 = vsyncadd [#allocation8], 0
      %s54 = sshll.u32 %s3, 4
      %s55 = int_to_ptr.hbm [resolvable:$true] %s54
      %s56 = sshll.u32 [#allocation7], 4
      %s57 = int_to_ptr.vmem [resolvable:$true] %s56
      %62 = dma.hbm_to_vmem [thread:$0]  %s55, 1024, %s57, [#allocation8], 128, 128, 8
    $region17: #{tpu_custom_call.1} parent=1 // pred_fallthru
      _
    // Predicated region
    $region18: #{tpu_custom_call.1} parent=1 // pred_check
      _
    $region19: #{tpu_custom_call.1} parent=1 // pred_check_branch
      %64 = sbr.rel (0) target = $region21
    $region20: #{tpu_custom_call.1} parent=1 // pred_region
      %66 = vsyncadd [#allocation8], 0
      %s68 = sshll.u32 %s4, 4
      %s69 = int_to_ptr.hbm [resolvable:$true] %s68
      %s70 = sshll.u32 [#allocation9], 4
      %s71 = int_to_ptr.vmem [resolvable:$true] %s70
      %73 = dma.hbm_to_vmem [thread:$0]  %s69, 128, %s71, [#allocation8]
    $region21: #{tpu_custom_call.1} parent=1 // pred_fallthru
      _
    // Predicated region
    $region22: #{tpu_custom_call.1} parent=1 // pred_check
      _
    $region23: #{tpu_custom_call.1} parent=1 // pred_check_branch
      %75 = sbr.rel (0) target = $region25
    $region24: #{tpu_custom_call.1} parent=1 // pred_region
      %77 = dma.done [#allocation3], 128
    $region25: #{tpu_custom_call.1} parent=1 // pred_fallthru
      _
    // Predicated region
    $region26: #{tpu_custom_call.1} parent=1 // pred_check
      _
    $region27: #{tpu_custom_call.1} parent=1 // pred_check_branch
      %79 = sbr.rel (0) target = $region29
    $region28: #{tpu_custom_call.1} parent=1 // pred_region
      %81 = dma.done [#allocation5], 1152
    $region29: #{tpu_custom_call.1} parent=1 // pred_fallthru
      _
    // Predicated region
    $region30: #{tpu_custom_call.1} parent=1 // pred_check
      _
    $region31: #{tpu_custom_call.1} parent=1 // pred_check_branch
      %83 = sbr.rel (0) target = $region33
    $region32: #{tpu_custom_call.1} parent=1 // pred_region
      %85 = dma.done [#allocation5], 1024
    $region33: #{tpu_custom_call.1} parent=1 // pred_fallthru
      _
    // Predicated region
    $region34: #{tpu_custom_call.1} parent=1 // pred_check
      _
    $region35: #{tpu_custom_call.1} parent=1 // pred_check_branch
      %87 = sbr.rel (0) target = $region37
    $region36: #{tpu_custom_call.1} parent=1 // pred_region
      %89 = dma.done [#allocation8], 1024
    $region37: #{tpu_custom_call.1} parent=1 // pred_fallthru
      _
    // Predicated region
    $region38: #{tpu_custom_call.1} parent=1 // pred_check
      _
    $region39: #{tpu_custom_call.1} parent=1 // pred_check_branch
      %91 = sbr.rel (0) target = $region41
    $region40: #{tpu_custom_call.1} parent=1 // pred_region
      %93 = dma.done [#allocation8], 128
    $region41: #{tpu_custom_call.1} parent=1 // pred_fallthru
      _
    %v94 = vld [vmem:[#allocation2] sm:$0xff]
    %v95 = vld [vmem:[#allocation4] sm:$0xff]
    %v96 = vld [vmem:[#allocation4 + $0x8] sm:$0xff]
    %v97 = vld [vmem:[#allocation4 + $0x10] sm:$0xff]
    %v98 = vld [vmem:[#allocation4 + $0x18] sm:$0xff]
    %v99 = vld [vmem:[#allocation4 + $0x20] sm:$0xff]
    %v100 = vld [vmem:[#allocation4 + $0x28] sm:$0xff]
    %v101 = vld [vmem:[#allocation4 + $0x30] sm:$0xff]
    %v102 = vld [vmem:[#allocation4 + $0x38] sm:$0xff]
    %v103 = vld [vmem:[#allocation4 + $0x40] sm:$0xff]
    %v104 = vld [vmem:[#allocation6] sm:$0xff]
    %v105 = vld [vmem:[#allocation6 + $0x8] sm:$0xff]
    %v106 = vld [vmem:[#allocation6 + $0x10] sm:$0xff]
    %v107 = vld [vmem:[#allocation6 + $0x18] sm:$0xff]
    %v108 = vld [vmem:[#allocation6 + $0x20] sm:$0xff]
    %v109 = vld [vmem:[#allocation6 + $0x28] sm:$0xff]
    %v110 = vld [vmem:[#allocation6 + $0x30] sm:$0xff]
    %v111 = vld [vmem:[#allocation6 + $0x38] sm:$0xff]
    %v112 = vld [vmem:[#allocation9] sm:$0x7f]
    %v113 = vperm.slane %v112, 0
    %vm114 = vcmask 588800
    %v116 = vsel %vm114, %v94, 0
    %118 = vmatpush.msra.mxu0 0.0
    %119 = vmatpush.msra.mxu0 0.0
    %120 = vmatpush.msra.mxu0 0.0
    %121 = vmatpush.msra.mxu0 0.0
    %122 = vmatpush.msra.mxu0 0.0
    %123 = vmatpush.msra.mxu0 0.0
    %124 = vmatpush.msra.mxu0 0.0
    %125 = vmatpush.msra.mxu0 %v103
    %126 = vmatpush.msra.mxu0 %v102
    %127 = vmatpush.msra.mxu0 %v101
    %128 = vmatpush.msra.mxu0 %v100
    %129 = vmatpush.msra.mxu0 %v99
    %130 = vmatpush.msra.mxu0 %v98
    %131 = vmatpush.msra.mxu0 %v97
    %132 = vmatpush.msra.mxu0 %v96
    %133 = vmatpush.msra.mxu0 %v95
    %134 = vmatmul.f32.gmra.mxu0 %v116
    %v135 = vpop.f32.mrf.mxu0
    %v136 = vadd.f32 %v113, %v135
    %137 = vdwg.mxu0
    %v138 = vmax.f32 %v136, 0.0
    %140 = vrot.lane.b32.xlu0 %v138, 96
    %v141 = vpop.permute.xlu0 %140
    %v142 = vperm.slane %v112, 1
    %vm143 = vcmask 261120
    %v144 = vsel %vm143, %v138, 0
    %146 = vmatpush.msra.mxu0 0.0
    %147 = vmatpush.msra.mxu0 0.0
    %148 = vmatpush.msra.mxu0 0.0
    %149 = vmatpush.msra.mxu0 0.0
    %150 = vmatpush.msra.mxu0 0.0
    %151 = vmatpush.msra.mxu0 0.0
    %152 = vmatpush.msra.mxu0 0.0
    %153 = vmatpush.msra.mxu0 0.0
    %154 = vmatpush.msra.mxu0 0.0
    %155 = vmatpush.msra.mxu0 0.0
    %156 = vmatpush.msra.mxu0 0.0
    %157 = vmatpush.msra.mxu0 0.0
    %158 = vmatpush.msra.mxu0 %v110
    %159 = vmatpush.msra.mxu0 %v108
    %160 = vmatpush.msra.mxu0 %v106
    %161 = vmatpush.msra.mxu0 %v104
    %162 = vmatmul.f32.gmra.mxu0 %v144
    %v163 = vpop.f32.mrf.mxu0
    %v164 = vadd.f32 %v142, %v163
    %165 = vdwg.mxu0
    %166 = vrot.lane.b32.xlu0 %v141, 96
    %v167 = vpop.permute.xlu0 %166
    %172 = vrot.lane.b32.xlu0 %v104, 96
    %v173 = vpop.permute.xlu0 %172
    %174 = vrot.lane.b32.xlu0 %v106, 96
    %v175 = vpop.permute.xlu0 %174
    %176 = vrot.lane.b32.xlu0 %v108, 96
    %v177 = vpop.permute.xlu0 %176
    %178 = vrot.lane.b32.xlu0 %v110, 96
    %v179 = vpop.permute.xlu0 %178
    %185 = vrot.lane.b32.xlu0 %v142, 96
    %v186 = vpop.permute.xlu0 %185
    %v188 = vsel %vm143, %v141, 0
    %v190 = vsel %vm143, %v167, 0
    %192 = vmatpush.msra.mxu0 0.0
    %193 = vmatpush.msra.mxu0 0.0
    %194 = vmatpush.msra.mxu0 0.0
    %195 = vmatpush.msra.mxu0 0.0
    %196 = vmatpush.msra.mxu0 0.0
    %197 = vmatpush.msra.mxu0 0.0
    %198 = vmatpush.msra.mxu0 0.0
    %199 = vmatpush.msra.mxu0 0.0
    %200 = vmatpush.msra.mxu0 0.0
    %201 = vmatpush.msra.mxu0 0.0
    %202 = vmatpush.msra.mxu0 0.0
    %203 = vmatpush.msra.mxu0 0.0
    %204 = vmatpush.msra.mxu0 %v179
    %205 = vmatpush.msra.mxu0 %v177
    %206 = vmatpush.msra.mxu0 %v175
    %207 = vmatpush.msra.mxu0 %v173
    %208 = vmatmul.f32.gmra.mxu0 %v188
    %v209 = vpop.f32.mrf.mxu0
    %v210 = vadd.f32 %v186, %v209
    %211 = vmatmul.f32.gmra.mxu0 %v190
    %v212 = vpop.f32.mrf.mxu0
    %v213 = vadd.f32 %v186, %v212
    %214 = vdwg.mxu0
    %v215 = vmul.f32 %v164, %v210
    %v216 = vmul.f32 %v164, %v213
    %v217 = vsel %vm143, %v215, 0.0
    %218 = vadd.xlane.f32.xlu0 %v217
    %v219 = vpop.xlane.xlu0 %218
    %v220 = vsel %vm143, %v216, 0.0
    %221 = vadd.xlane.f32.xlu0 %v220
    %v222 = vpop.xlane.xlu0 %221
    %v223 = vmax.f32 %v219, %v222
    %v224 = vsub.f32 %v219, %v223
    %v225 = vmul.f32 %v224, 1.442695
    %v226 = vpow.pop %v225
    %v227 = vsub.f32 %v222, %v223
    %v228 = vmul.f32 %v227, 1.442695
    %v229 = vpow.pop %v228
    %v230 = vadd.f32 %v226, %v229
    %v231 = vrcp.pop %v230
    %v232 = vmul.f32 %v226, %v231
    %v233 = vmul.f32 %v232, %v210
    %v234 = vmul.f32 %v229, %v231
    %v235 = vmul.f32 %v234, %v213
    %v236 = vadd.f32 %v233, %v235
    %v237 = vperm.slane %v112, 2
    %239 = vrot.lane.b32.xlu0 %v236, 96
    %v240 = vpop.permute.xlu0 %239
    %241 = vrot.lane.b32.xlu0 %v104, 32
    %v242 = vpop.permute.xlu0 %241
    %243 = vrot.lane.b32.xlu0 %v106, 32
    %v244 = vpop.permute.xlu0 %243
    %245 = vrot.lane.b32.xlu0 %v108, 32
    %v246 = vpop.permute.xlu0 %245
    %247 = vrot.lane.b32.xlu0 %v110, 32
    %v248 = vpop.permute.xlu0 %247
    %v253 = vsel %vm143, %v240, 0
    %255 = vmatpush.msra.mxu0 0.0
    %256 = vmatpush.msra.mxu0 0.0
    %257 = vmatpush.msra.mxu0 0.0
    %258 = vmatpush.msra.mxu0 0.0
    %259 = vmatpush.msra.mxu0 0.0
    %260 = vmatpush.msra.mxu0 0.0
    %261 = vmatpush.msra.mxu0 0.0
    %262 = vmatpush.msra.mxu0 0.0
    %263 = vmatpush.msra.mxu0 0.0
    %264 = vmatpush.msra.mxu0 0.0
    %265 = vmatpush.msra.mxu0 0.0
    %266 = vmatpush.msra.mxu0 0.0
    %267 = vmatpush.msra.mxu0 %v248
    %268 = vmatpush.msra.mxu0 %v246
    %269 = vmatpush.msra.mxu0 %v244
    %270 = vmatpush.msra.mxu0 %v242
    %271 = vmatmul.f32.gmra.mxu0 %v253
    %v272 = vpop.f32.mrf.mxu0
    %v273 = vadd.f32 %v237, %v272
    %274 = vdwg.mxu0
    %v275 = vld [vmem:[#allocation7] sm:$0xff]
    %v276 = vld [vmem:[#allocation7 + $0x8] sm:$0xff]
    %v277 = vld [vmem:[#allocation7 + $0x10] sm:$0xff]
    %v278 = vld [vmem:[#allocation7 + $0x18] sm:$0xff]
    %v279 = vperm.slane %v112, 3
    %v281 = vsel %vm143, %v273, 0
    %283 = vmatpush.msra.mxu0 0.0
    %284 = vmatpush.msra.mxu0 0.0
    %285 = vmatpush.msra.mxu0 0.0
    %286 = vmatpush.msra.mxu0 0.0
    %287 = vmatpush.msra.mxu0 0.0
    %288 = vmatpush.msra.mxu0 0.0
    %289 = vmatpush.msra.mxu0 0.0
    %290 = vmatpush.msra.mxu0 0.0
    %291 = vmatpush.msra.mxu0 0.0
    %292 = vmatpush.msra.mxu0 0.0
    %293 = vmatpush.msra.mxu0 0.0
    %294 = vmatpush.msra.mxu0 0.0
    %295 = vmatpush.msra.mxu0 %v278
    %296 = vmatpush.msra.mxu0 %v277
    %297 = vmatpush.msra.mxu0 %v276
    %298 = vmatpush.msra.mxu0 %v275
    %299 = vmatmul.f32.gmra.mxu0 %v281
    %v300 = vpop.f32.mrf.mxu0
    %v301 = vadd.f32 %v279, %v300
    %302 = vdwg.mxu0
    %v303 = vsel %vm143, %v301, 0.0
    %v304 = vrot.slane %v303, 4
    %v305 = vadd.f32 %v303, %v304
    %v306 = vrot.slane %v305, 2
    %v307 = vadd.f32 %v305, %v306
    %v308 = vrot.slane %v307, 1
    %v309 = vadd.f32 %v307, %v308
    %v310 = vrcp.pop 8.0
    %v311 = vmul.f32 8.0, %v310
    %v312 = vsub.f32 1.0, %v311
    %v313 = vmul.f32 %v310, %v312
    %v314 = vadd.f32 %v310, %v313
    %vm315 = vweird.f32 %v310
    %v316 = vsel %vm315, %v310, %v314
    %v317 = vmul.f32 %v309, %v316
    %v318 = vmul.f32 %v301, %v301
    %v319 = vsel %vm143, %v318, 0.0
    %v320 = vrot.slane %v319, 4
    %v321 = vadd.f32 %v319, %v320
    %v322 = vrot.slane %v321, 2
    %v323 = vadd.f32 %v321, %v322
    %v324 = vrot.slane %v323, 1
    %v325 = vadd.f32 %v323, %v324
    %v326 = vmul.f32 %v325, %v316
    %v327 = vmul.f32 %v317, %v317
    %v328 = vsub.f32 %v326, %v327
    %v329 = vadd.f32 %v328, 1e-05
    %v330 = vrsqrt.pop %v329
    %v331 = vmul.f32 %v330, %v329
    %v332 = vmul.f32 %v331, %v330
    %v333 = vmul.f32 0.5, %v332
    %v334 = vsub.f32 1.5, %v333
    %v335 = vmul.f32 %v330, %v334
    %vm336 = vweird.f32 %v329
    %vm337 = vweird.f32 %v330
    %vm338 = vmor %vm336, %vm337
    %v339 = vsel %vm338, %v330, %v335
    %341 = vrot.lane.b32.xlu0 %v339, 32
    %v342 = vpop.permute.xlu0 %341
    %v344 = vmul.f32 %v112, %v342
    %v346 = vrot.slane %v344, 3
    %347 = vrot.lane.b32.xlu0 %v346, 96
    %v348 = vpop.permute.xlu0 %347
    %v350 = vmul.f32 %v317, %v348
    %v352 = vrot.slane %v350, 5
    %353 = vrot.lane.b32.xlu0 %v352, 64
    %v354 = vpop.permute.xlu0 %353
    %v356 = vsub.f32 %v112, %v354
    %v357 = vperm.slane %v344, 3
    %359 = vrot.lane.b32.xlu0 %v357, 96
    %v360 = vpop.permute.xlu0 %359
    %v362 = vmul.f32 %v301, %v360
    %v363 = vperm.slane %v356, 3
    %365 = vrot.lane.b32.xlu0 %v363, 64
    %v366 = vpop.permute.xlu0 %365
    %v368 = vadd.f32 %v362, %v366
    %v369 = vmax.f32 %v368, 0.0
    %v370 = vperm.slane %v112, 4
    %375 = vrot.lane.b32.xlu0 %v275, 96
    %v376 = vpop.permute.xlu0 %375
    %377 = vrot.lane.b32.xlu0 %v276, 96
    %v378 = vpop.permute.xlu0 %377
    %379 = vrot.lane.b32.xlu0 %v277, 96
    %v380 = vpop.permute.xlu0 %379
    %381 = vrot.lane.b32.xlu0 %v278, 96
    %v382 = vpop.permute.xlu0 %381
    %v388 = vsel %vm143, %v369, 0
    %390 = vmatpush.msra.mxu0 0.0
    %391 = vmatpush.msra.mxu0 0.0
    %392 = vmatpush.msra.mxu0 0.0
    %393 = vmatpush.msra.mxu0 0.0
    %394 = vmatpush.msra.mxu0 0.0
    %395 = vmatpush.msra.mxu0 0.0
    %396 = vmatpush.msra.mxu0 0.0
    %397 = vmatpush.msra.mxu0 0.0
    %398 = vmatpush.msra.mxu0 0.0
    %399 = vmatpush.msra.mxu0 0.0
    %400 = vmatpush.msra.mxu0 0.0
    %401 = vmatpush.msra.mxu0 0.0
    %402 = vmatpush.msra.mxu0 %v382
    %403 = vmatpush.msra.mxu0 %v380
    %404 = vmatpush.msra.mxu0 %v378
    %405 = vmatpush.msra.mxu0 %v376
    %406 = vmatmul.f32.gmra.mxu0 %v388
    %v407 = vpop.f32.mrf.mxu0
    %v408 = vadd.f32 %v370, %v407
    %409 = vdwg.mxu0
    %v410 = vsel %vm143, %v408, 0.0
    %v411 = vrot.slane %v410, 4
    %v412 = vadd.f32 %v410, %v411
    %v413 = vrot.slane %v412, 2
    %v414 = vadd.f32 %v412, %v413
    %v415 = vrot.slane %v414, 1
    %v416 = vadd.f32 %v414, %v415
    %v417 = vmul.f32 %v416, %v316
    %v418 = vmul.f32 %v408, %v408
    %v419 = vsel %vm143, %v418, 0.0
    %v420 = vrot.slane %v419, 4
    %v421 = vadd.f32 %v419, %v420
    %v422 = vrot.slane %v421, 2
    %v423 = vadd.f32 %v421, %v422
    %v424 = vrot.slane %v423, 1
    %v425 = vadd.f32 %v423, %v424
    %v426 = vmul.f32 %v425, %v316
    %v427 = vmul.f32 %v417, %v417
    %v428 = vsub.f32 %v426, %v427
    %v429 = vadd.f32 %v428, 1e-05
    %v430 = vrsqrt.pop %v429
    %v431 = vmul.f32 %v430, %v429
    %v432 = vmul.f32 %v431, %v430
    %v433 = vmul.f32 0.5, %v432
    %v434 = vsub.f32 1.5, %v433
    %v435 = vmul.f32 %v430, %v434
    %vm436 = vweird.f32 %v429
    %vm437 = vweird.f32 %v430
    %vm438 = vmor %vm436, %vm437
    %v439 = vsel %vm438, %v430, %v435
    %441 = vrot.lane.b32.xlu0 %v439, 32
    %v442 = vpop.permute.xlu0 %441
    %v444 = vmul.f32 %v112, %v442
    %v446 = vrot.slane %v444, 4
    %447 = vrot.lane.b32.xlu0 %v446, 96
    %v448 = vpop.permute.xlu0 %447
    %v450 = vmul.f32 %v417, %v448
    %v452 = vrot.slane %v450, 4
    %453 = vrot.lane.b32.xlu0 %v452, 64
    %v454 = vpop.permute.xlu0 %453
    %v456 = vsub.f32 %v112, %v454
    %v457 = vperm.slane %v444, 4
    %459 = vrot.lane.b32.xlu0 %v457, 96
    %v460 = vpop.permute.xlu0 %459
    %v462 = vmul.f32 %v408, %v460
    %v463 = vperm.slane %v456, 4
    %465 = vrot.lane.b32.xlu0 %v463, 64
    %v466 = vpop.permute.xlu0 %465
    %v468 = vadd.f32 %v462, %v466
    %v469 = vadd.f32 %v468, %v273
    %v470 = vmax.f32 %v469, 0.0
    %s471 = scalar_lea.vmem [#allocation7], 32
    %v472 = vld [vmem:[%s471] sm:$0xff]
    %v473 = vld [vmem:[%s471 + $0x8] sm:$0xff]
    %v474 = vld [vmem:[%s471 + $0x10] sm:$0xff]
    %v475 = vld [vmem:[%s471 + $0x18] sm:$0xff]
    %v476 = vperm.slane %v112, 5
    %v478 = vsel %vm143, %v470, 0
    %480 = vmatpush.msra.mxu0 0.0
    %481 = vmatpush.msra.mxu0 0.0
    %482 = vmatpush.msra.mxu0 0.0
    %483 = vmatpush.msra.mxu0 0.0
    %484 = vmatpush.msra.mxu0 0.0
    %485 = vmatpush.msra.mxu0 0.0
    %486 = vmatpush.msra.mxu0 0.0
    %487 = vmatpush.msra.mxu0 0.0
    %488 = vmatpush.msra.mxu0 0.0
    %489 = vmatpush.msra.mxu0 0.0
    %490 = vmatpush.msra.mxu0 0.0
    %491 = vmatpush.msra.mxu0 0.0
    %492 = vmatpush.msra.mxu0 %v475
    %493 = vmatpush.msra.mxu0 %v474
    %494 = vmatpush.msra.mxu0 %v473
    %495 = vmatpush.msra.mxu0 %v472
    %496 = vmatmul.f32.gmra.mxu0 %v478
    %v497 = vpop.f32.mrf.mxu0
    %v498 = vadd.f32 %v476, %v497
    %499 = vdwg.mxu0
    %v500 = vsel %vm143, %v498, 0.0
    %v501 = vrot.slane %v500, 4
    %v502 = vadd.f32 %v500, %v501
    %v503 = vrot.slane %v502, 2
    %v504 = vadd.f32 %v502, %v503
    %v505 = vrot.slane %v504, 1
    %v506 = vadd.f32 %v504, %v505
    %v507 = vmul.f32 %v506, %v316
    %v508 = vmul.f32 %v498, %v498
    %v509 = vsel %vm143, %v508, 0.0
    %v510 = vrot.slane %v509, 4
    %v511 = vadd.f32 %v509, %v510
    %v512 = vrot.slane %v511, 2
    %v513 = vadd.f32 %v511, %v512
    %v514 = vrot.slane %v513, 1
    %v515 = vadd.f32 %v513, %v514
    %v516 = vmul.f32 %v515, %v316
    %v517 = vmul.f32 %v507, %v507
    %v518 = vsub.f32 %v516, %v517
    %v519 = vadd.f32 %v518, 1e-05
    %v520 = vrsqrt.pop %v519
    %v521 = vmul.f32 %v520, %v519
    %v522 = vmul.f32 %v521, %v520
    %v523 = vmul.f32 0.5, %v522
    %v524 = vsub.f32 1.5, %v523
    %v525 = vmul.f32 %v520, %v524
    %vm526 = vweird.f32 %v519
    %vm527 = vweird.f32 %v520
    %vm528 = vmor %vm526, %vm527
    %v529 = vsel %vm528, %v520, %v525
    %531 = vrot.lane.b32.xlu0 %v529, 32
    %v532 = vpop.permute.xlu0 %531
    %v534 = vmul.f32 %v112, %v532
    %v536 = vrot.slane %v534, 5
    %537 = vrot.lane.b32.xlu0 %v536, 96
    %v538 = vpop.permute.xlu0 %537
    %v540 = vmul.f32 %v507, %v538
    %v542 = vrot.slane %v540, 3
    %543 = vrot.lane.b32.xlu0 %v542, 64
    %v544 = vpop.permute.xlu0 %543
    %v546 = vsub.f32 %v112, %v544
    %v547 = vperm.slane %v534, 5
    %549 = vrot.lane.b32.xlu0 %v547, 96
    %v550 = vpop.permute.xlu0 %549
    %v552 = vmul.f32 %v498, %v550
    %v553 = vperm.slane %v546, 5
    %555 = vrot.lane.b32.xlu0 %v553, 64
    %v556 = vpop.permute.xlu0 %555
    %v558 = vadd.f32 %v552, %v556
    %v559 = vmax.f32 %v558, 0.0
    %v560 = vperm.slane %v112, 6
    %565 = vrot.lane.b32.xlu0 %v472, 96
    %v566 = vpop.permute.xlu0 %565
    %567 = vrot.lane.b32.xlu0 %v473, 96
    %v568 = vpop.permute.xlu0 %567
    %569 = vrot.lane.b32.xlu0 %v474, 96
    %v570 = vpop.permute.xlu0 %569
    %571 = vrot.lane.b32.xlu0 %v475, 96
    %v572 = vpop.permute.xlu0 %571
    %v578 = vsel %vm143, %v559, 0
    %580 = vmatpush.msra.mxu0 0.0
    %581 = vmatpush.msra.mxu0 0.0
    %582 = vmatpush.msra.mxu0 0.0
    %583 = vmatpush.msra.mxu0 0.0
    %584 = vmatpush.msra.mxu0 0.0
    %585 = vmatpush.msra.mxu0 0.0
    %586 = vmatpush.msra.mxu0 0.0
    %587 = vmatpush.msra.mxu0 0.0
    %588 = vmatpush.msra.mxu0 0.0
    %589 = vmatpush.msra.mxu0 0.0
    %590 = vmatpush.msra.mxu0 0.0
    %591 = vmatpush.msra.mxu0 0.0
    %592 = vmatpush.msra.mxu0 %v572
    %593 = vmatpush.msra.mxu0 %v570
    %594 = vmatpush.msra.mxu0 %v568
    %595 = vmatpush.msra.mxu0 %v566
    %596 = vmatmul.f32.gmra.mxu0 %v578
    %v597 = vpop.f32.mrf.mxu0
    %v598 = vadd.f32 %v560, %v597
    %599 = vdwg.mxu0
    %v600 = vsel %vm143, %v598, 0.0
    %v601 = vrot.slane %v600, 4
    %v602 = vadd.f32 %v600, %v601
    %v603 = vrot.slane %v602, 2
    %v604 = vadd.f32 %v602, %v603
    %v605 = vrot.slane %v604, 1
    %v606 = vadd.f32 %v604, %v605
    %v607 = vmul.f32 %v606, %v316
    %v608 = vmul.f32 %v598, %v598
    %v609 = vsel %vm143, %v608, 0.0
    %v610 = vrot.slane %v609, 4
    %v611 = vadd.f32 %v609, %v610
    %v612 = vrot.slane %v611, 2
    %v613 = vadd.f32 %v611, %v612
    %v614 = vrot.slane %v613, 1
    %v615 = vadd.f32 %v613, %v614
    %v616 = vmul.f32 %v615, %v316
    %v617 = vmul.f32 %v607, %v607
    %v618 = vsub.f32 %v616, %v617
    %v619 = vadd.f32 %v618, 1e-05
    %v620 = vrsqrt.pop %v619
    %v621 = vmul.f32 %v620, %v619
    %v622 = vmul.f32 %v621, %v620
    %v623 = vmul.f32 0.5, %v622
    %v624 = vsub.f32 1.5, %v623
    %v625 = vmul.f32 %v620, %v624
    %vm626 = vweird.f32 %v619
    %vm627 = vweird.f32 %v620
    %vm628 = vmor %vm626, %vm627
    %v629 = vsel %vm628, %v620, %v625
    %631 = vrot.lane.b32.xlu0 %v629, 32
    %v632 = vpop.permute.xlu0 %631
    %v634 = vmul.f32 %v112, %v632
    %v636 = vrot.slane %v634, 6
    %637 = vrot.lane.b32.xlu0 %v636, 96
    %v638 = vpop.permute.xlu0 %637
    %v640 = vmul.f32 %v607, %v638
    %v642 = vrot.slane %v640, 2
    %643 = vrot.lane.b32.xlu0 %v642, 64
    %v644 = vpop.permute.xlu0 %643
    %v646 = vsub.f32 %v112, %v644
    %v647 = vperm.slane %v634, 6
    %649 = vrot.lane.b32.xlu0 %v647, 96
    %v650 = vpop.permute.xlu0 %649
    %v652 = vmul.f32 %v598, %v650
    %v653 = vperm.slane %v646, 6
    %655 = vrot.lane.b32.xlu0 %v653, 64
    %v656 = vpop.permute.xlu0 %655
    %v658 = vadd.f32 %v652, %v656
    %v659 = vadd.f32 %v658, %v470
    %v660 = vmax.f32 %v659, 0.0
    %662 = vrot.lane.b32.xlu0 %v237, 96
    %v663 = vpop.permute.xlu0 %662
    %v666 = vsel %vm143, %v660, 0
    %668 = vmatpush.msra.mxu0 0.0
    %669 = vmatpush.msra.mxu0 0.0
    %670 = vmatpush.msra.mxu0 0.0
    %671 = vmatpush.msra.mxu0 0.0
    %672 = vmatpush.msra.mxu0 0.0
    %673 = vmatpush.msra.mxu0 0.0
    %674 = vmatpush.msra.mxu0 0.0
    %675 = vmatpush.msra.mxu0 0.0
    %676 = vmatpush.msra.mxu0 0.0
    %677 = vmatpush.msra.mxu0 0.0
    %678 = vmatpush.msra.mxu0 0.0
    %679 = vmatpush.msra.mxu0 0.0
    %680 = vmatpush.msra.mxu0 %v111
    %681 = vmatpush.msra.mxu0 %v109
    %682 = vmatpush.msra.mxu0 %v107
    %683 = vmatpush.msra.mxu0 %v105
    %684 = vmatmul.f32.gmra.mxu0 %v666
    %v685 = vpop.f32.mrf.mxu0
    %v686 = vadd.f32 %v663, %v685
    %687 = vdwg.mxu0
    %vm688 = vcmask 31744
    %689 = vst.msk [vmem:[%s5] sm:$0xff] %vm688, %v686
    // Predicated region
    $region42: #{tpu_custom_call.1} parent=1 // pred_check
      _
    $region43: #{tpu_custom_call.1} parent=1 // pred_check_branch
      %691 = sbr.rel (0) target = $region45
    $region44: #{tpu_custom_call.1} parent=1 // pred_region
      _
    $region45: #{tpu_custom_call.1} parent=1 // pred_fallthru
      _
    // Predicated region
    $region46: #{tpu_custom_call.1} parent=1 // pred_check
      _
    $region47: #{tpu_custom_call.1} parent=1 // pred_check_branch
      %693 = sbr.rel (0) target = $region49
    $region48: #{tpu_custom_call.1} parent=1 // pred_region
      _
    $region49: #{tpu_custom_call.1} parent=1 // pred_fallthru
      _
    %694 = vsyncpa [#allocation3], 1
    %695 = vsyncpa [#allocation5], 1
    %696 = vsyncpa [#allocation8], 1

</llo_original>
